<compile_context>
chip_gen: v7x
topology: tpu7x:2x2x1
jax: 0.10.0
libtpu: 0.0.40
codegen_flags: <defaults>
</compile_context>

<pallas_src>
import math

import jax
import jax.numpy as jnp
from jax.experimental import pallas as pl
from jax.experimental.pallas import tpu as pltpu


def _round_up(v: int, m: int) -> int:
    return ((v + m - 1) // m) * m


def _encoder_kernel(x_ref, w_ref, b_ref, o_ref):
    # Dropout(p=0.5) -> identity at inference; fused Linear + ReLU.
    h = jnp.dot(x_ref[...], w_ref[...], preferred_element_type=jnp.float32)
    h = h + b_ref[...]                      # (1, N_pad) bias broadcasts over rows
    o_ref[...] = jnp.maximum(h, 0.0).astype(o_ref.dtype)


def prepare_static_features_encoder_params(weight_t, bias, *, dtype=jnp.float32):
    """Pad parameters ONCE at setup time (hoisted out of the per-call path).

    weight_t : (in_features, out_features) == PyTorch nn.Linear.weight.T
    bias     : (out_features,)
    dtype    : operand dtype for the matmul (jnp.bfloat16 opt-in halves weight/x traffic;
               accumulation stays float32).
    Returns (w_p, b_p, out_features) with out_features padded to 128 lanes.
    """
    K, N = weight_t.shape
    N_pad = _round_up(N, 128)
    w_p = jnp.zeros((K, N_pad), dtype).at[:, :N].set(weight_t.astype(dtype))
    b_p = jnp.zeros((1, N_pad), jnp.float32).at[0, :N].set(bias.astype(jnp.float32))
    return w_p, b_p, N


def _choose_batch_tiling(B: int, sublane: int, max_batch_tile: int):
    """Pick (batch_tile, B_pad). Single step for small B; even step count for large B (v7x 2 TCs)."""
    if B <= max_batch_tile:
        bt = _round_up(max(B, sublane), sublane)
        return bt, bt
    steps = -(-B // max_batch_tile)
    if steps % 2:                 # even number of steps -> both v7x TensorCores get equal work
        steps += 1
    bt = _round_up(-(-B // steps), sublane)
    return bt, steps * bt


def _make_call(batch_tile, K, N_pad, grid, out_dtype, cost, vmem_limit, single_buffer_weights):
    if single_buffer_weights:
        w_spec = pl.BlockSpec((K, N_pad), lambda i: (0, 0), pipeline_mode=pl.Buffered(1))
        b_spec = pl.BlockSpec((1, N_pad), lambda i: (0, 0), pipeline_mode=pl.Buffered(1))
    else:
        w_spec = pl.BlockSpec((K, N_pad), lambda i: (0, 0))
        b_spec = pl.BlockSpec((1, N_pad), lambda i: (0, 0))
    return pl.pallas_call(
        _encoder_kernel,
        out_shape=jax.ShapeDtypeStruct((grid[0] * batch_tile, N_pad), out_dtype),
        grid_spec=pltpu.PrefetchScalarGridSpec(
            num_scalar_prefetch=0,
            grid=grid,
            in_specs=[
                pl.BlockSpec((batch_tile, K), lambda i: (i, 0)),   # x tile (K unpadded = full dim)
                w_spec,                                            # weight (grid-invariant)
                b_spec,                                            # bias   (grid-invariant)
            ],
            out_specs=pl.BlockSpec((batch_tile, N_pad), lambda i: (i, 0)),
        ),
        compiler_params=pltpu.CompilerParams(
            dimension_semantics=("parallel",),
            vmem_limit_bytes=vmem_limit,
        ),
        cost_estimate=cost,
    )


def static_features_encoder_forward(x, w_p, b_p, out_features, *,
                                    max_batch_tile=2048, return_padded=False):
    """Fused Dropout(eval) -> Linear -> ReLU.

    x            : (B, in_features) float32 (or bfloat16, opt-in)
    w_p, b_p     : padded params from prepare_static_features_encoder_params
    out_features : true (unpadded) output width
    return_padded: if True, return (B, N_pad) and skip the non-lane-dense lane slice
                   (consumers that can handle the padded layout avoid an extra HBM pass).
    """
    B, K = x.shape
    Kw, N_pad = w_p.shape
    assert K == Kw, "weight/in_features mismatch"

    # Sublane minimum: 8 rows for 32-bit, 16 for 16-bit operands.
    sublane = 8 if jnp.dtype(x.dtype).itemsize == 4 else 16
    batch_tile, B_pad = _choose_batch_tiling(B, sublane, max_batch_tile)

    # Skip the x copy entirely when no batch padding is needed (common case).
    if B_pad != B:
        x_p = jnp.zeros((B_pad, K), x.dtype).at[:B].set(x)
    else:
        x_p = x

    grid = (B_pad // batch_tile,)

    x_itemsize = jnp.dtype(x.dtype).itemsize
    w_itemsize = jnp.dtype(w_p.dtype).itemsize
    cost = pl.CostEstimate(
        flops=2 * B_pad * K * N_pad,
        transcendentals=0,
        bytes_accessed=(B_pad * K * x_itemsize + K * N_pad * w_itemsize
                        + N_pad * 4 + B_pad * N_pad * 4),
    )

    # VMEM estimate: x + out double-buffered, weight/bias single-buffered.  Only raise the scoped
    # limit when we'd approach v5e's 16 MiB default; cap at 64 MiB so the same value is v7x-safe.
    est_vmem = (2 * batch_tile * (K * x_itemsize + N_pad * 4)
                + K * N_pad * w_itemsize + N_pad * 4)
    vmem_limit = None
    if est_vmem > 12 * 1024 * 1024:
        vmem_limit = min(64 * 1024 * 1024, _round_up(int(est_vmem * 3 // 2), 1024))

    try:
        out_p = _make_call(batch_tile, K, N_pad, grid, jnp.float32, cost, vmem_limit,
                           single_buffer_weights=True)(x_p, w_p, b_p)
    except Exception:
        # Fallback for jax builds without BlockSpec pipeline_mode / Buffered(1) support.
        out_p = _make_call(batch_tile, K, N_pad, grid, jnp.float32, cost, vmem_limit,
                           single_buffer_weights=False)(x_p, w_p, b_p)

    # NOTE: padded batch rows hold ReLU(bias) != 0 -> always strip the batch padding.
    if return_padded:
        return out_p[:B] if B_pad != B else out_p
    return out_p[:B, :out_features]


def _reference(x, weight_t, bias):
    return jnp.maximum(x @ weight_t + bias, 0.0)


if __name__ == "__main__":
    # Small shapes consistent with StaticFeaturesEncoder(in_features, out_features)
    in_features = 8
    out_features = 24
    batch = 16

    key = jax.random.PRNGKey(0)
    kx, kw, kb = jax.random.split(key, 3)

    x = jax.random.normal(kx, (batch, in_features), dtype=jnp.float32)

    # PyTorch nn.Linear-style init: uniform(+/- 1/sqrt(fan_in)); weight stored transposed.
    bound = 1.0 / math.sqrt(in_features)
    weight_t = jax.random.uniform(kw, (in_features, out_features), jnp.float32,
                                  minval=-bound, maxval=bound)
    bias = jax.random.uniform(kb, (out_features,), jnp.float32,
                              minval=-bound, maxval=bound)

    # Parameters are padded once, outside the per-call path.
    w_p, b_p, n_out = prepare_static_features_encoder_params(weight_t, bias)

    out = static_features_encoder_forward(x, w_p, b_p, n_out)
    out = jax.block_until_ready(out)

    ref = _reference(x, weight_t, bias)
    assert out.shape == (batch, out_features)
    assert jnp.allclose(out, ref, atol=1e-5, rtol=1e-5), "mismatch vs reference"

    print("KERNEL_OK")
</pallas_src>

<mosaic_0001>
module attributes {stable_mosaic.version = 11 : i64} {
  func.func @_encoder_kernel(%arg0: i32, %arg1: memref<16x8xf32, #tpu.memory_space<vmem>>, %arg2: memref<8x128xf32, #tpu.memory_space<vmem>>, %arg3: memref<1x128xf32, #tpu.memory_space<vmem>>, %arg4: memref<16x128xf32, #tpu.memory_space<vmem>>) attributes {dimension_semantics = [#tpu.dimension_semantics<parallel>], iteration_bounds = array<i64: 1>, scalar_prefetch = 0 : i64, scratch_operands = 0 : i64, tpu.core_type = #tpu.core_type<tc>, window_params = [{transform_indices = @transform_0, window_bounds = array<i64: 16, 8>}, {pipeline_mode = #tpu.pipeline_mode<synchronous>, transform_indices = @transform_1, window_bounds = array<i64: 8, 128>}, {pipeline_mode = #tpu.pipeline_mode<synchronous>, transform_indices = @transform_2, window_bounds = array<i64: 1, 128>}, {transform_indices = @transform_3, window_bounds = array<i64: 16, 128>}]} {
    %c0 = arith.constant 0 : index
    %c0_0 = arith.constant 0 : index
    %0 = vector.load %arg1[%c0, %c0_0] : memref<16x8xf32, #tpu.memory_space<vmem>>, vector<16x8xf32>
    %c0_1 = arith.constant 0 : index
    %c0_2 = arith.constant 0 : index
    %1 = vector.load %arg2[%c0_1, %c0_2] : memref<8x128xf32, #tpu.memory_space<vmem>>, vector<8x128xf32>
    %cst = arith.constant dense<0.000000e+00> : vector<16x128xf32>
    %2 = tpu.matmul %0, %1, %cst {dimension_numbers = #tpu.dot_dimension_numbers<[1], [0], [0], [1], [0, 0, 1, 1], [], []>} : vector<16x8xf32>, vector<8x128xf32>, vector<16x128xf32> -> vector<16x128xf32>
    %c0_3 = arith.constant 0 : index
    %c0_4 = arith.constant 0 : index
    %3 = vector.load %arg3[%c0_3, %c0_4] : memref<1x128xf32, #tpu.memory_space<vmem>>, vector<1x128xf32>
    %4 = vector.broadcast %3 : vector<1x128xf32> to vector<16x128xf32>
    %5 = arith.addf %2, %4 : vector<16x128xf32>
    %cst_5 = arith.constant 0.000000e+00 : f32
    %6 = vector.broadcast %cst_5 : f32 to vector<16x128xf32>
    %7 = arith.maximumf %5, %6 : vector<16x128xf32>
    %c0_6 = arith.constant 0 : index
    %c0_7 = arith.constant 0 : index
    %8 = vector.load %arg4[%c0_6, %c0_7] : memref<16x128xf32, #tpu.memory_space<vmem>>, vector<16x128xf32>
    tpu.vector_store %arg4[%c0_6, %c0_7], %7 {strides = array<i32>} : memref<16x128xf32, #tpu.memory_space<vmem>>, vector<16x128xf32>,
    return
  }
  func.func @transform_0(%arg0: i32) -> (i32, i32) {
    %c0_i32 = arith.constant 0 : i32
    %c0_i32_0 = arith.constant 0 : i32
    return %arg0, %c0_i32 : i32, i32
  }
  func.func @transform_1(%arg0: i32) -> (i32, i32) {
    %c0_i32 = arith.constant 0 : i32
    %c0_i32_0 = arith.constant 0 : i32
    %c0_i32_1 = arith.constant 0 : i32
    return %c0_i32, %c0_i32_0 : i32, i32
  }
  func.func @transform_2(%arg0: i32) -> (i32, i32) {
    %c0_i32 = arith.constant 0 : i32
    %c0_i32_0 = arith.constant 0 : i32
    %c0_i32_1 = arith.constant 0 : i32
    return %c0_i32, %c0_i32_0 : i32, i32
  }
  func.func @transform_3(%arg0: i32) -> (i32, i32) {
    %c0_i32 = arith.constant 0 : i32
    %c0_i32_0 = arith.constant 0 : i32
    return %arg0, %c0_i32 : i32, i32
  }
}

module attributes {stable_mosaic.version = 11 : i64} {
  func.func @_encoder_kernel(%arg0: i32, %arg1: memref<16x8xf32, #tpu.memory_space<vmem>>, %arg2: memref<8x128xf32, #tpu.memory_space<vmem>>, %arg3: memref<1x128xf32, #tpu.memory_space<vmem>>, %arg4: memref<16x128xf32, #tpu.memory_space<vmem>>) attributes {dimension_semantics = [#tpu.dimension_semantics<parallel>], iteration_bounds = array<i64: 1>, scalar_prefetch = 0 : i64, scratch_operands = 0 : i64, tpu.core_type = #tpu.core_type<tc>, window_params = [{transform_indices = @transform_0, window_bounds = array<i64: 16, 8>}, {pipeline_mode = #tpu.pipeline_mode<synchronous>, transform_indices = @transform_1, window_bounds = array<i64: 8, 128>}, {pipeline_mode = #tpu.pipeline_mode<synchronous>, transform_indices = @transform_2, window_bounds = array<i64: 1, 128>}, {transform_indices = @transform_3, window_bounds = array<i64: 16, 128>}]} {
    %c0 = arith.constant 0 : index
    %c0_0 = arith.constant 0 : index
    %0 = vector.load %arg1[%c0, %c0_0] : memref<16x8xf32, #tpu.memory_space<vmem>>, vector<16x8xf32>
    %c0_1 = arith.constant 0 : index
    %c0_2 = arith.constant 0 : index
    %1 = vector.load %arg2[%c0_1, %c0_2] : memref<8x128xf32, #tpu.memory_space<vmem>>, vector<8x128xf32>
    %cst = arith.constant dense<0.000000e+00> : vector<16x128xf32>
    %2 = tpu.matmul %0, %1, %cst {dimension_numbers = #tpu.dot_dimension_numbers<[1], [0], [0], [1], [0, 0, 1, 1], [], []>} : vector<16x8xf32>, vector<8x128xf32>, vector<16x128xf32> -> vector<16x128xf32>
    %c0_3 = arith.constant 0 : index
    %c0_4 = arith.constant 0 : index
    %3 = vector.load %arg3[%c0_3, %c0_4] : memref<1x128xf32, #tpu.memory_space<vmem>>, vector<1x128xf32>
    %4 = vector.broadcast %3 : vector<1x128xf32> to vector<16x128xf32>
    %5 = arith.addf %2, %4 : vector<16x128xf32>
    %cst_5 = arith.constant 0.000000e+00 : f32
    %6 = vector.broadcast %cst_5 : f32 to vector<16x128xf32>
    %7 = arith.maximumf %5, %6 : vector<16x128xf32>
    %c0_6 = arith.constant 0 : index
    %c0_7 = arith.constant 0 : index
    %8 = vector.load %arg4[%c0_6, %c0_7] : memref<16x128xf32, #tpu.memory_space<vmem>>, vector<16x128xf32>
    tpu.vector_store %arg4[%c0_6, %c0_7], %7 {strides = array<i32>} : memref<16x128xf32, #tpu.memory_space<vmem>>, vector<16x128xf32>,
    return
  }
  func.func @transform_0(%arg0: i32) -> (i32, i32) {
    %c0_i32 = arith.constant 0 : i32
    %c0_i32_0 = arith.constant 0 : i32
    return %arg0, %c0_i32 : i32, i32
  }
  func.func @transform_1(%arg0: i32) -> (i32, i32) {
    %c0_i32 = arith.constant 0 : i32
    %c0_i32_0 = arith.constant 0 : i32
    %c0_i32_1 = arith.constant 0 : i32
    return %c0_i32, %c0_i32_0 : i32, i32
  }
  func.func @transform_2(%arg0: i32) -> (i32, i32) {
    %c0_i32 = arith.constant 0 : i32
    %c0_i32_0 = arith.constant 0 : i32
    %c0_i32_1 = arith.constant 0 : i32
    return %c0_i32, %c0_i32_0 : i32, i32
  }
  func.func @transform_3(%arg0: i32) -> (i32, i32) {
    %c0_i32 = arith.constant 0 : i32
    %c0_i32_0 = arith.constant 0 : i32
    return %arg0, %c0_i32 : i32, i32
  }
}

</mosaic_0001>

<llo_original>
// kernel: tpu_custom_call.1
$region0: #{tpu_custom_call.1}
  #allocation0 [shape = 'u32[]', space=smem, size = 0x4, offset = 0x4, fixed_abs, tag = 'smem constant byte address 0x4 - core index']
  #allocation1 [shape = 'u32[144,128]{1,0:T(1,128)}', space=vmem, size = 0x12000, scoped, tag = 'internal scratch']
  %s0 = inlined_call_operand.vmem [shape: f32[16,8], index: 0, kind: input, shape index: {}]
  %s1 = inlined_call_operand.vmem [shape: f32[8,128], index: 1, kind: input, shape index: {}]
  %s2 = inlined_call_operand.vmem [shape: f32[1,128], index: 2, kind: input, shape index: {}]
  %s3 = inlined_call_operand.hbm [shape: f32[16,128], index: 3, kind: output, shape index: {}]
  %s4 = sld [smem:[#allocation0]]
  $region22: #{tpu_custom_call.1} parent=0
    _
  %s6 = ssub.s32 1, %s4
  %s7 = scalar_select 0, %s6, %s4
  $region1: #{tpu_custom_call.1} parent=0
    #allocation2 [shape = 'u8[8192]{0}', space=vmem, size = 0x2000, scoped, tag = 'output window, operand 0, single buffered']
    #allocation3 [shape = 's32[1]{0}', space=sflag, size = 0x4, scoped, tag = 'scoped memory for tpu_custom_call.1']
    %8 = vsyncpa [#allocation3], 0
    // Predicated region
    $region2: #{tpu_custom_call.1} parent=1 // pred_check
      _
    $region3: #{tpu_custom_call.1} parent=1 // pred_check_branch
      %10 = sbr.rel (0) target = $region5
    $region4: #{tpu_custom_call.1} parent=1 // pred_region
      _
    $region5: #{tpu_custom_call.1} parent=1 // pred_fallthru
      _
    // Predicated region
    $region6: #{tpu_custom_call.1} parent=1 // pred_check
      _
    $region7: #{tpu_custom_call.1} parent=1 // pred_check_branch
      %12 = sbr.rel (0) target = $region9
    $region8: #{tpu_custom_call.1} parent=1 // pred_region
      _
    $region9: #{tpu_custom_call.1} parent=1 // pred_fallthru
      _
    // Predicated region
    $region10: #{tpu_custom_call.1} parent=1 // pred_check
      _
    $region11: #{tpu_custom_call.1} parent=1 // pred_check_branch
      %14 = sbr.rel (0) target = $region13
    $region12: #{tpu_custom_call.1} parent=1 // pred_region
      _
    $region13: #{tpu_custom_call.1} parent=1 // pred_fallthru
      _
    %v15 = vld [vmem:[%s0] sm:$0xff]
    %v16 = vld [vmem:[%s0 + $0x8] sm:$0xff]
    %v17 = vld [vmem:[%s1] sm:$0xff]
    %v18 = vld [vmem:[%s2] sm:$0x1]
    %v20 = vlaneseq
    %v21 = vshrl.u32 %v20, 7
    %v22 = vsub.s32 0, %v21
    %v23 = vrot.slane %v18, %v22
    %vm25 = vcmask 64512
    %v27 = vsel %vm25, %v15, 0
    %v30 = vsel %vm25, %v16, 0
    %32 = vmatprep.subr.mxu0 0.0
    %33 = vmatpush1.msra.mxu0 %v17
    %34 = vmatprep.subr.mxu0 0.0
    %35 = vmatpush1.msra.mxu0 0.0
    %36 = vmatprep.subr.mxu0 0.0
    %37 = vmatpush1.msra.mxu0 0.0
    %38 = vmatprep.subr.mxu0 0.0
    %39 = vmatpush1.msra.mxu0 0.0
    %40 = vmatprep.subr.mxu0 0.0
    %41 = vmatpush1.msra.mxu0 0.0
    %42 = vmatprep.subr.mxu0 0.0
    %43 = vmatpush1.msra.mxu0 0.0
    %44 = vmatprep.subr.mxu0 0.0
    %45 = vmatpush1.msra.mxu0 0.0
    %46 = vmatprep.subr.mxu0 0.0
    %47 = vmatpush1.msra.mxu0 0.0
    %48 = vmatprep.subr.mxu0 0.0
    %49 = vmatpush1.msra.mxu0 0.0
    %50 = vmatprep.subr.mxu0 0.0
    %51 = vmatpush1.msra.mxu0 0.0
    %52 = vmatprep.subr.mxu0 0.0
    %53 = vmatpush1.msra.mxu0 0.0
    %54 = vmatprep.subr.mxu0 0.0
    %55 = vmatpush1.msra.mxu0 0.0
    %56 = vmatprep.subr.mxu0 0.0
    %57 = vmatpush1.msra.mxu0 0.0
    %58 = vmatprep.subr.mxu0 0.0
    %59 = vmatpush1.msra.mxu0 0.0
    %60 = vmatprep.subr.mxu0 0.0
    %61 = vmatpush1.msra.mxu0 0.0
    %62 = vmatprep.subr.mxu0 0.0
    %63 = vmatpush1.msra.mxu0 0.0
    %64 = vmatprep.subr.mxu0 0.0
    %65 = vmatpush1.msra.mxu0 0.0
    %66 = vmatprep.subr.mxu0 0.0
    %67 = vmatpush1.msra.mxu0 0.0
    %68 = vmatprep.subr.mxu0 0.0
    %69 = vmatpush1.msra.mxu0 0.0
    %70 = vmatprep.subr.mxu0 0.0
    %71 = vmatpush1.msra.mxu0 0.0
    %72 = vmatprep.subr.mxu0 0.0
    %73 = vmatpush1.msra.mxu0 0.0
    %74 = vmatprep.subr.mxu0 0.0
    %75 = vmatpush1.msra.mxu0 0.0
    %76 = vmatprep.subr.mxu0 0.0
    %77 = vmatpush1.msra.mxu0 0.0
    %78 = vmatprep.subr.mxu0 0.0
    %79 = vmatpush1.msra.mxu0 0.0
    %80 = vmatprep.subr.mxu0 0.0
    %81 = vmatpush1.msra.mxu0 0.0
    %82 = vmatprep.subr.mxu0 0.0
    %83 = vmatpush1.msra.mxu0 0.0
    %84 = vmatprep.subr.mxu0 0.0
    %85 = vmatpush1.msra.mxu0 0.0
    %86 = vmatprep.subr.mxu0 0.0
    %87 = vmatpush1.msra.mxu0 0.0
    %88 = vmatprep.subr.mxu0 0.0
    %89 = vmatpush1.msra.mxu0 0.0
    %90 = vmatprep.subr.mxu0 0.0
    %91 = vmatpush1.msra.mxu0 0.0
    %92 = vmatprep.subr.mxu0 0.0
    %93 = vmatpush1.msra.mxu0 0.0
    %94 = vmatprep.subr.mxu0 0.0
    %95 = vmatpush1.msra.mxu0 0.0
    %96 = vmatprep.mubr.f32.mxu0 0.0
    %97 = vmatmul.mubr.f32.gmra.mrb[0].mxu0 %v27
    %v98 = vpop.f32.mrb[0].mxu0
    %v99 = vadd.f32 %v23, %v98
    %v100 = vpop.f32.mrb[0].mxu0
    %101 = vmatprep.mubr.f32.mxu0 0.0
    %102 = vmatmul.mubr.f32.gmra.mrb[0].mxu0 %v30
    %v103 = vpop.f32.mrb[0].mxu0
    %v104 = vadd.f32 %v23, %v103
    %v105 = vpop.f32.mrb[0].mxu0
    %106 = vdwg.mxu0
    %v107 = vmax.f32 %v99, 0.0
    %v108 = vmax.f32 %v104, 0.0
    %109 = vst [vmem:[#allocation2] sm:$0xff] %v107
    %110 = vst [vmem:[#allocation2 + $0x8] sm:$0xff] %v108
    // Predicated region
    $region14: #{tpu_custom_call.1} parent=1 // pred_check
      _
    $region15: #{tpu_custom_call.1} parent=1 // pred_check_branch
      %112 = sbr.rel (0) target = $region17
    $region16: #{tpu_custom_call.1} parent=1 // pred_region
      %s114 = ssub.s32 256, 256
      %115 = vsyncadd [#allocation3], %s114
      %s116 = sshll.u32 [#allocation2], 4
      %s117 = int_to_ptr.vmem [resolvable:$true] %s116
      %122 = dma.vmem_to_hbm [thread:$0]  %s117, 256, %s3, [#allocation3], 128, 128, 8
    $region17: #{tpu_custom_call.1} parent=1 // pred_fallthru
      _
    // Predicated region
    $region18: #{tpu_custom_call.1} parent=1 // pred_check
      _
    $region19: #{tpu_custom_call.1} parent=1 // pred_check_branch
      %124 = sbr.rel (0) target = $region21
    $region20: #{tpu_custom_call.1} parent=1 // pred_region
      %125 = dma.done [#allocation3], 256
    $region21: #{tpu_custom_call.1} parent=1 // pred_fallthru
      _
    %126 = vsyncpa [#allocation3], 1

// kernel: tpu_custom_call.1
$region0: #{tpu_custom_call.1}
  #allocation0 [shape = 'u32[]', space=smem, size = 0x4, offset = 0x4, fixed_abs, tag = 'smem constant byte address 0x4 - core index']
  #allocation1 [shape = 'u32[144,128]{1,0:T(1,128)}', space=vmem, size = 0x12000, scoped, tag = 'internal scratch']
  %s0 = inlined_call_operand.vmem [shape: f32[16,8], index: 0, kind: input, shape index: {}]
  %s1 = inlined_call_operand.vmem [shape: f32[8,128], index: 1, kind: input, shape index: {}]
  %s2 = inlined_call_operand.vmem [shape: f32[1,128], index: 2, kind: input, shape index: {}]
  %s3 = inlined_call_operand.hbm [shape: f32[16,128], index: 3, kind: output, shape index: {}]
  %s4 = sld [smem:[#allocation0]]
  $region22: #{tpu_custom_call.1} parent=0
    _
  %s6 = ssub.s32 1, %s4
  %s7 = scalar_select 0, %s6, %s4
  $region1: #{tpu_custom_call.1} parent=0
    #allocation2 [shape = 'u8[8192]{0}', space=vmem, size = 0x2000, scoped, tag = 'output window, operand 0, single buffered']
    #allocation3 [shape = 's32[1]{0}', space=sflag, size = 0x4, scoped, tag = 'scoped memory for tpu_custom_call.1']
    %8 = vsyncpa [#allocation3], 0
    // Predicated region
    $region2: #{tpu_custom_call.1} parent=1 // pred_check
      _
    $region3: #{tpu_custom_call.1} parent=1 // pred_check_branch
      %10 = sbr.rel (0) target = $region5
    $region4: #{tpu_custom_call.1} parent=1 // pred_region
      _
    $region5: #{tpu_custom_call.1} parent=1 // pred_fallthru
      _
    // Predicated region
    $region6: #{tpu_custom_call.1} parent=1 // pred_check
      _
    $region7: #{tpu_custom_call.1} parent=1 // pred_check_branch
      %12 = sbr.rel (0) target = $region9
    $region8: #{tpu_custom_call.1} parent=1 // pred_region
      _
    $region9: #{tpu_custom_call.1} parent=1 // pred_fallthru
      _
    // Predicated region
    $region10: #{tpu_custom_call.1} parent=1 // pred_check
      _
    $region11: #{tpu_custom_call.1} parent=1 // pred_check_branch
      %14 = sbr.rel (0) target = $region13
    $region12: #{tpu_custom_call.1} parent=1 // pred_region
      _
    $region13: #{tpu_custom_call.1} parent=1 // pred_fallthru
      _
    %v15 = vld [vmem:[%s0] sm:$0xff]
    %v16 = vld [vmem:[%s0 + $0x8] sm:$0xff]
    %v17 = vld [vmem:[%s1] sm:$0xff]
    %v18 = vld [vmem:[%s2] sm:$0x1]
    %v20 = vlaneseq
    %v21 = vshrl.u32 %v20, 7
    %v22 = vsub.s32 0, %v21
    %v23 = vrot.slane %v18, %v22
    %vm25 = vcmask 64512
    %v27 = vsel %vm25, %v15, 0
    %v30 = vsel %vm25, %v16, 0
    %32 = vmatprep.subr.mxu0 0.0
    %33 = vmatpush1.msra.mxu0 %v17
    %34 = vmatprep.subr.mxu0 0.0
    %35 = vmatpush1.msra.mxu0 0.0
    %36 = vmatprep.subr.mxu0 0.0
    %37 = vmatpush1.msra.mxu0 0.0
    %38 = vmatprep.subr.mxu0 0.0
    %39 = vmatpush1.msra.mxu0 0.0
    %40 = vmatprep.subr.mxu0 0.0
    %41 = vmatpush1.msra.mxu0 0.0
    %42 = vmatprep.subr.mxu0 0.0
    %43 = vmatpush1.msra.mxu0 0.0
    %44 = vmatprep.subr.mxu0 0.0
    %45 = vmatpush1.msra.mxu0 0.0
    %46 = vmatprep.subr.mxu0 0.0
    %47 = vmatpush1.msra.mxu0 0.0
    %48 = vmatprep.subr.mxu0 0.0
    %49 = vmatpush1.msra.mxu0 0.0
    %50 = vmatprep.subr.mxu0 0.0
    %51 = vmatpush1.msra.mxu0 0.0
    %52 = vmatprep.subr.mxu0 0.0
    %53 = vmatpush1.msra.mxu0 0.0
    %54 = vmatprep.subr.mxu0 0.0
    %55 = vmatpush1.msra.mxu0 0.0
    %56 = vmatprep.subr.mxu0 0.0
    %57 = vmatpush1.msra.mxu0 0.0
    %58 = vmatprep.subr.mxu0 0.0
    %59 = vmatpush1.msra.mxu0 0.0
    %60 = vmatprep.subr.mxu0 0.0
    %61 = vmatpush1.msra.mxu0 0.0
    %62 = vmatprep.subr.mxu0 0.0
    %63 = vmatpush1.msra.mxu0 0.0
    %64 = vmatprep.subr.mxu0 0.0
    %65 = vmatpush1.msra.mxu0 0.0
    %66 = vmatprep.subr.mxu0 0.0
    %67 = vmatpush1.msra.mxu0 0.0
    %68 = vmatprep.subr.mxu0 0.0
    %69 = vmatpush1.msra.mxu0 0.0
    %70 = vmatprep.subr.mxu0 0.0
    %71 = vmatpush1.msra.mxu0 0.0
    %72 = vmatprep.subr.mxu0 0.0
    %73 = vmatpush1.msra.mxu0 0.0
    %74 = vmatprep.subr.mxu0 0.0
    %75 = vmatpush1.msra.mxu0 0.0
    %76 = vmatprep.subr.mxu0 0.0
    %77 = vmatpush1.msra.mxu0 0.0
    %78 = vmatprep.subr.mxu0 0.0
    %79 = vmatpush1.msra.mxu0 0.0
    %80 = vmatprep.subr.mxu0 0.0
    %81 = vmatpush1.msra.mxu0 0.0
    %82 = vmatprep.subr.mxu0 0.0
    %83 = vmatpush1.msra.mxu0 0.0
    %84 = vmatprep.subr.mxu0 0.0
    %85 = vmatpush1.msra.mxu0 0.0
    %86 = vmatprep.subr.mxu0 0.0
    %87 = vmatpush1.msra.mxu0 0.0
    %88 = vmatprep.subr.mxu0 0.0
    %89 = vmatpush1.msra.mxu0 0.0
    %90 = vmatprep.subr.mxu0 0.0
    %91 = vmatpush1.msra.mxu0 0.0
    %92 = vmatprep.subr.mxu0 0.0
    %93 = vmatpush1.msra.mxu0 0.0
    %94 = vmatprep.subr.mxu0 0.0
    %95 = vmatpush1.msra.mxu0 0.0
    %96 = vmatprep.mubr.f32.mxu0 0.0
    %97 = vmatmul.mubr.f32.gmra.mrb[0].mxu0 %v27
    %v98 = vpop.f32.mrb[0].mxu0
    %v99 = vadd.f32 %v23, %v98
    %v100 = vpop.f32.mrb[0].mxu0
    %101 = vmatprep.mubr.f32.mxu0 0.0
    %102 = vmatmul.mubr.f32.gmra.mrb[0].mxu0 %v30
    %v103 = vpop.f32.mrb[0].mxu0
    %v104 = vadd.f32 %v23, %v103
    %v105 = vpop.f32.mrb[0].mxu0
    %106 = vdwg.mxu0
    %v107 = vmax.f32 %v99, 0.0
    %v108 = vmax.f32 %v104, 0.0
    %109 = vst [vmem:[#allocation2] sm:$0xff] %v107
    %110 = vst [vmem:[#allocation2 + $0x8] sm:$0xff] %v108
    // Predicated region
    $region14: #{tpu_custom_call.1} parent=1 // pred_check
      _
    $region15: #{tpu_custom_call.1} parent=1 // pred_check_branch
      %112 = sbr.rel (0) target = $region17
    $region16: #{tpu_custom_call.1} parent=1 // pred_region
      %s114 = ssub.s32 256, 256
      %115 = vsyncadd [#allocation3], %s114
      %s116 = sshll.u32 [#allocation2], 4
      %s117 = int_to_ptr.vmem [resolvable:$true] %s116
      %122 = dma.vmem_to_hbm [thread:$0]  %s117, 256, %s3, [#allocation3], 128, 128, 8
    $region17: #{tpu_custom_call.1} parent=1 // pred_fallthru
      _
    // Predicated region
    $region18: #{tpu_custom_call.1} parent=1 // pred_check
      _
    $region19: #{tpu_custom_call.1} parent=1 // pred_check_branch
      %124 = sbr.rel (0) target = $region21
    $region20: #{tpu_custom_call.1} parent=1 // pred_region
      %125 = dma.done [#allocation3], 256
    $region21: #{tpu_custom_call.1} parent=1 // pred_fallthru
      _
    %126 = vsyncpa [#allocation3], 1

</llo_original>
